<compile_context>
chip_gen: v7x
topology: tpu7x:2x2x1
jax: 0.10.0
libtpu: 0.0.40
codegen_flags: <defaults>
</compile_context>

<pallas_src>
import functools

import jax
import jax.numpy as jnp
from jax.experimental import pallas as pl
from jax.experimental.pallas import tpu as pltpu

LANE = 128
SUBLANE = 8


def _round_up(x, m):
    return (x + m - 1) // m * m


def mlp_kernel(x_ref, w1_ref, b1_ref, w2_ref, b2_ref, o_ref):
    # fc1 on the MXU: bf16 inputs, f32 accumulation.
    x = x_ref[...]
    if x.dtype != jnp.bfloat16:          # no-op if the caller already hands bf16
        x = x.astype(jnp.bfloat16)
    h = jnp.dot(x, w1_ref[...], preferred_element_type=jnp.float32)
    h = jnp.maximum(h + b1_ref[...], 0.0)              # bias + ReLU in f32 (VPU)

    # fc2 on the MXU: bf16 inputs, f32 accumulation.
    logits = jnp.dot(h.astype(jnp.bfloat16), w2_ref[...],
                     preferred_element_type=jnp.float32)
    logits = logits + b2_ref[...]                       # padded class lanes -> -1e30

    # Softmax over the class axis (eval-mode), numerically stabilized, all f32.
    m = jnp.max(logits, axis=-1, keepdims=True)
    e = jnp.exp(logits - m)                             # padded lanes -> exp(-huge) == 0
    denom = jnp.sum(e, axis=-1, keepdims=True)
    o_ref[...] = (e / denom).astype(o_ref.dtype)        # exact divide; bf16 store


def prepare_params(w1, b1, w2, b2):
    """One-time (init) prep: transpose to [in, out], pad lane dims to 128, cast to bf16.

    PyTorch layout in: w1 [H, K], b1 [H], w2 [C, H], b2 [C].
    Returns (w1_t [K, H_pad] bf16, b1 [1, H_pad] f32,
             w2_t [H_pad, C_pad] bf16, b2 [1, C_pad] f32, num_classes).
    """
    H, K = w1.shape
    C, H2 = w2.shape
    assert H2 == H
    H_pad = _round_up(H, LANE)
    C_pad = _round_up(C, LANE)

    w1_t = jnp.zeros((K, H_pad), jnp.bfloat16).at[:, :H].set(w1.T.astype(jnp.bfloat16))
    b1_p = jnp.zeros((1, H_pad), jnp.float32).at[0, :H].set(b1.astype(jnp.float32))
    w2_t = jnp.zeros((H_pad, C_pad), jnp.bfloat16).at[:H, :C].set(w2.T.astype(jnp.bfloat16))
    # Padded class lanes get a huge negative bias -> exp() == 0 -> no softmax pollution.
    b2_p = jnp.full((1, C_pad), -1e30, jnp.float32).at[0, :C].set(b2.astype(jnp.float32))
    return w1_t, b1_p, w2_t, b2_p, C


def _choose_tiling(B, tile_b):
    """Pick (batch_tile, grid_steps): fewest steps with tiles <= tile_b rows,
    but >= 2 steps when the batch is big enough so v7x megacore has work."""
    B_eff = max(B, SUBLANE)
    steps = max(pl.cdiv(B_eff, tile_b), 2 if B_eff >= 2 * SUBLANE else 1)
    if steps > 2 and steps % 2:
        steps += 1                         # even step count -> clean 2-way megacore split
    tb = _round_up(pl.cdiv(B_eff, steps), SUBLANE)
    return tb, pl.cdiv(B, tb)              # steps actually needed to cover B


@functools.partial(jax.jit, static_argnames=("num_classes", "tile_b", "out_dtype"))
def baseline_model_forward(x, w1_t, b1_p, w2_t, b2_p, *, num_classes,
                           tile_b=1024, out_dtype=jnp.bfloat16):
    """x: [B, input_size] (f32 or bf16). Returns softmax probs [B, num_classes] (out_dtype)."""
    B, K = x.shape
    H_pad = w1_t.shape[1]
    C_pad = w2_t.shape[1]

    tb, steps = _choose_tiling(B, tile_b)
    grid = (steps,)
    out_itemsize = jnp.dtype(out_dtype).itemsize

    # VMEM footprint estimate: double-buffered x/out tiles + resident weights
    # (x2 buffers) + f32 intermediates (h / logits / e).  Only raise the scoped
    # VMEM limit when the estimate approaches v5e's 16 MiB default.
    vmem_est = (2 * tb * K * x.dtype.itemsize
                + 2 * tb * C_pad * out_itemsize
                + 2 * (w1_t.size * 2 + w2_t.size * 2 + (H_pad + C_pad) * 4)
                + 3 * tb * max(H_pad, C_pad) * 4)
    vmem_limit = (min(int(1.5 * vmem_est), 60 * 1024 * 1024)
                  if vmem_est > 12 * 1024 * 1024 else None)

    rows = steps * tb
    flops = 2 * rows * (K * H_pad + H_pad * C_pad)
    bytes_accessed = (B * K * x.dtype.itemsize
                      + w1_t.size * w1_t.dtype.itemsize
                      + w2_t.size * w2_t.dtype.itemsize
                      + (b1_p.size + b2_p.size) * 4
                      + B * C_pad * out_itemsize)
    cost = pl.CostEstimate(flops=flops, transcendentals=rows * C_pad,
                           bytes_accessed=bytes_accessed)

    out = pl.pallas_call(
        mlp_kernel,
        out_shape=jax.ShapeDtypeStruct((B, C_pad), out_dtype),
        grid=grid,
        in_specs=[
            # x tile: pipelined per grid step.  Kept at the default 2-deep
            # buffering: with the tiling above the grid is usually only a few
            # steps, so a 3rd buffer would be dead VMEM; revisit
            # pipeline_mode=pl.Buffered(3) only if profiles show exposed x DMA
            # at very large B.
            pl.BlockSpec((tb, K), lambda i: (i, 0)),
            # Weights/biases: constant index_map -> stay resident in VMEM.
            pl.BlockSpec((K, H_pad), lambda i: (0, 0)),
            pl.BlockSpec((1, H_pad), lambda i: (0, 0)),
            pl.BlockSpec((H_pad, C_pad), lambda i: (0, 0)),
            pl.BlockSpec((1, C_pad), lambda i: (0, 0)),
        ],
        out_specs=pl.BlockSpec((tb, C_pad), lambda i: (i, 0)),
        compiler_params=pltpu.CompilerParams(
            dimension_semantics=("parallel",),   # megacore on v7x (grid has >= 2 steps)
            vmem_limit_bytes=vmem_limit,
        ),
        cost_estimate=cost,
    )(x, w1_t, b1_p, w2_t, b2_p)

    # Rows are already exact (Pallas masks the partial last batch block), so no
    # row slice / jnp.pad is needed; only the cheap lane slice to num_classes.
    return out[:, :num_classes]


if __name__ == "__main__":
    # Small shapes consistent with the module's forward: [batch, input_size]
    B, input_size, hidden_size, num_classes = 50, 32, 32, 16

    key = jax.random.PRNGKey(0)
    kx, kw1, kb1, kw2, kb2 = jax.random.split(key, 5)

    x = jax.random.normal(kx, (B, input_size), dtype=jnp.float32)
    # Deterministic param init (nn.Linear-like uniform bounds)
    bound1 = 1.0 / (input_size ** 0.5)
    w1 = jax.random.uniform(kw1, (hidden_size, input_size),
                            minval=-bound1, maxval=bound1, dtype=jnp.float32)
    b1 = jax.random.uniform(kb1, (hidden_size,),
                            minval=-bound1, maxval=bound1, dtype=jnp.float32)
    bound2 = 1.0 / (hidden_size ** 0.5)
    w2 = jax.random.uniform(kw2, (num_classes, hidden_size),
                            minval=-bound2, maxval=bound2, dtype=jnp.float32)
    b2 = jax.random.uniform(kb2, (num_classes,),
                            minval=-bound2, maxval=bound2, dtype=jnp.float32)

    # One-time init-style prep (hoisted out of the per-call forward path).
    w1_t, b1_p, w2_t, b2_p, C = prepare_params(w1, b1, w2, b2)

    # Default tile_b=1024: at B=50 this yields a 2-step grid (megacore-friendly)
    # with a masked partial last block and no per-call jnp.pad.
    out = baseline_model_forward(x, w1_t, b1_p, w2_t, b2_p, num_classes=C)
    out = jax.block_until_ready(out)

    # Reference in plain f32 JAX (eval-mode semantics: softmax over dim=1).
    h_ref = jnp.maximum(x @ w1.T + b1, 0.0)
    ref = jax.nn.softmax(h_ref @ w2.T + b2, axis=1)

    out_f32 = out.astype(jnp.float32)
    assert out.shape == (B, num_classes)
    # bf16 MXU inputs + bf16 output store -> compare at ~1e-2 level.
    assert jnp.allclose(out_f32, ref, atol=2e-2), (
        f"mismatch vs reference, max abs diff {jnp.max(jnp.abs(out_f32 - ref))}")
    assert jnp.allclose(jnp.sum(out_f32, axis=1), 1.0, atol=2e-2)

    print("KERNEL_OK")
</pallas_src>

<mosaic_0001>
module attributes {stable_mosaic.version = 11 : i64} {
  func.func @mlp_kernel(%arg0: i32, %arg1: memref<32x32xf32, #tpu.memory_space<vmem>>, %arg2: memref<32x128xbf16, #tpu.memory_space<vmem>>, %arg3: memref<1x128xf32, #tpu.memory_space<vmem>>, %arg4: memref<128x128xbf16, #tpu.memory_space<vmem>>, %arg5: memref<1x128xf32, #tpu.memory_space<vmem>>, %arg6: memref<32x128xbf16, #tpu.memory_space<vmem>>) attributes {dimension_semantics = [#tpu.dimension_semantics<parallel>], iteration_bounds = array<i64: 2>, scalar_prefetch = 0 : i64, scratch_operands = 0 : i64, tpu.core_type = #tpu.core_type<tc>, window_params = [{transform_indices = @transform_0, window_bounds = array<i64: 32, 32>}, {pipeline_mode = #tpu.pipeline_mode<synchronous>, transform_indices = @transform_1, window_bounds = array<i64: 32, 128>}, {pipeline_mode = #tpu.pipeline_mode<synchronous>, transform_indices = @transform_2, window_bounds = array<i64: 1, 128>}, {pipeline_mode = #tpu.pipeline_mode<synchronous>, transform_indices = @transform_3, window_bounds = array<i64: 128, 128>}, {pipeline_mode = #tpu.pipeline_mode<synchronous>, transform_indices = @transform_4, window_bounds = array<i64: 1, 128>}, {transform_indices = @transform_5, window_bounds = array<i64: 32, 128>}]} {
    %c0 = arith.constant 0 : index
    %c0_0 = arith.constant 0 : index
    %0 = vector.load %arg1[%c0, %c0_0] : memref<32x32xf32, #tpu.memory_space<vmem>>, vector<32x32xf32>
    %1 = arith.truncf %0 : vector<32x32xf32> to vector<32x32xbf16>
    %c0_1 = arith.constant 0 : index
    %c0_2 = arith.constant 0 : index
    %2 = vector.load %arg2[%c0_1, %c0_2] : memref<32x128xbf16, #tpu.memory_space<vmem>>, vector<32x128xbf16>
    %cst = arith.constant dense<0.000000e+00> : vector<32x128xf32>
    %3 = tpu.matmul %1, %2, %cst {dimension_numbers = #tpu.dot_dimension_numbers<[1], [0], [0], [1], [0, 0, 1, 1], [], []>} : vector<32x32xbf16>, vector<32x128xbf16>, vector<32x128xf32> -> vector<32x128xf32>
    %c0_3 = arith.constant 0 : index
    %c0_4 = arith.constant 0 : index
    %4 = vector.load %arg3[%c0_3, %c0_4] : memref<1x128xf32, #tpu.memory_space<vmem>>, vector<1x128xf32>
    %5 = vector.broadcast %4 : vector<1x128xf32> to vector<32x128xf32>
    %6 = arith.addf %3, %5 : vector<32x128xf32>
    %cst_5 = arith.constant 0.000000e+00 : f32
    %7 = vector.broadcast %cst_5 : f32 to vector<32x128xf32>
    %8 = arith.maximumf %6, %7 : vector<32x128xf32>
    %9 = arith.truncf %8 : vector<32x128xf32> to vector<32x128xbf16>
    %c0_6 = arith.constant 0 : index
    %c0_7 = arith.constant 0 : index
    %10 = vector.load %arg4[%c0_6, %c0_7] : memref<128x128xbf16, #tpu.memory_space<vmem>>, vector<128x128xbf16>
    %cst_8 = arith.constant dense<0.000000e+00> : vector<32x128xf32>
    %11 = tpu.matmul %9, %10, %cst_8 {dimension_numbers = #tpu.dot_dimension_numbers<[1], [0], [0], [1], [0, 0, 1, 1], [], []>} : vector<32x128xbf16>, vector<128x128xbf16>, vector<32x128xf32> -> vector<32x128xf32>
    %c0_9 = arith.constant 0 : index
    %c0_10 = arith.constant 0 : index
    %12 = vector.load %arg5[%c0_9, %c0_10] : memref<1x128xf32, #tpu.memory_space<vmem>>, vector<1x128xf32>
    %13 = vector.broadcast %12 : vector<1x128xf32> to vector<32x128xf32>
    %14 = arith.addf %11, %13 : vector<32x128xf32>
    %cst_11 = arith.constant dense<0xFF800000> : vector<32xf32>
    %15 = vector.multi_reduction <maximumf>, %14, %cst_11 [1] : vector<32x128xf32> to vector<32xf32>
    %16 = vector.shape_cast %15 : vector<32xf32> to vector<32x1xf32>
    %17 = vector.broadcast %16 : vector<32x1xf32> to vector<32x128xf32>
    %18 = arith.subf %14, %17 : vector<32x128xf32>
    %19 = math.exp %18 : vector<32x128xf32>
    %cst_12 = arith.constant dense<0.000000e+00> : vector<32xf32>
    %20 = vector.multi_reduction <add>, %19, %cst_12 [1] : vector<32x128xf32> to vector<32xf32>
    %21 = vector.shape_cast %20 : vector<32xf32> to vector<32x1xf32>
    %22 = vector.broadcast %21 : vector<32x1xf32> to vector<32x128xf32>
    %23 = arith.divf %19, %22 : vector<32x128xf32>
    %24 = arith.truncf %23 : vector<32x128xf32> to vector<32x128xbf16>
    %c0_13 = arith.constant 0 : index
    %c0_14 = arith.constant 0 : index
    %25 = vector.load %arg6[%c0_13, %c0_14] : memref<32x128xbf16, #tpu.memory_space<vmem>>, vector<32x128xbf16>
    tpu.vector_store %arg6[%c0_13, %c0_14], %24 {strides = array<i32>} : memref<32x128xbf16, #tpu.memory_space<vmem>>, vector<32x128xbf16>,
    return
  }
  func.func @transform_0(%arg0: i32) -> (i32, i32) {
    %c0_i32 = arith.constant 0 : i32
    %c0_i32_0 = arith.constant 0 : i32
    return %arg0, %c0_i32 : i32, i32
  }
  func.func @transform_1(%arg0: i32) -> (i32, i32) {
    %c0_i32 = arith.constant 0 : i32
    %c0_i32_0 = arith.constant 0 : i32
    %c0_i32_1 = arith.constant 0 : i32
    return %c0_i32, %c0_i32_0 : i32, i32
  }
  func.func @transform_2(%arg0: i32) -> (i32, i32) {
    %c0_i32 = arith.constant 0 : i32
    %c0_i32_0 = arith.constant 0 : i32
    %c0_i32_1 = arith.constant 0 : i32
    return %c0_i32, %c0_i32_0 : i32, i32
  }
  func.func @transform_3(%arg0: i32) -> (i32, i32) {
    %c0_i32 = arith.constant 0 : i32
    %c0_i32_0 = arith.constant 0 : i32
    %c0_i32_1 = arith.constant 0 : i32
    return %c0_i32, %c0_i32_0 : i32, i32
  }
  func.func @transform_4(%arg0: i32) -> (i32, i32) {
    %c0_i32 = arith.constant 0 : i32
    %c0_i32_0 = arith.constant 0 : i32
    %c0_i32_1 = arith.constant 0 : i32
    return %c0_i32, %c0_i32_0 : i32, i32
  }
  func.func @transform_5(%arg0: i32) -> (i32, i32) {
    %c0_i32 = arith.constant 0 : i32
    %c0_i32_0 = arith.constant 0 : i32
    return %arg0, %c0_i32 : i32, i32
  }
}

</mosaic_0001>

<llo_original>
// kernel: baseline_model_forward.1
$region0: #{baseline_model_forward.1}
  #allocation0 [shape = 'u32[]', space=smem, size = 0x4, offset = 0x4, fixed_abs, tag = 'smem constant byte address 0x4 - core index']
  #allocation1 [shape = 'u32[144,128]{1,0:T(1,128)}', space=vmem, size = 0x12000, scoped, tag = 'internal scratch']
  %s0 = inlined_call_operand.vmem [shape: f32[50,32], index: 0, kind: input, shape index: {}]
  %s1 = inlined_call_operand.vmem [shape: bf16[32,128], index: 1, kind: input, shape index: {}]
  %s2 = inlined_call_operand.vmem [shape: f32[1,128], index: 2, kind: input, shape index: {}]
  %s3 = inlined_call_operand.vmem [shape: bf16[128,128], index: 3, kind: input, shape index: {}]
  %s4 = inlined_call_operand.vmem [shape: f32[1,128], index: 4, kind: input, shape index: {}]
  %s5 = inlined_call_operand.vmem [shape: bf16[50,128], index: 5, kind: output, shape index: {}]
  %s6 = sld [smem:[#allocation0]]
  $region97: #{baseline_model_forward.1} parent=0
    _
  %s8 = ssub.s32 1, %s6
  %s9 = scalar_select 0, %s8, %s6
  $region1: #{baseline_model_forward.1} parent=0
    #allocation2 [shape = 'u8[16384]{0}', space=vmem, size = 0x4000, scoped, tag = 'output window, operand 0']
    loop: start=0, step=1, limit=4
    $region2: #{baseline_model_forward.1} parent=1 // loop_pre_header
      _
    $region3: #{baseline_model_forward.1} parent=1 // loop_header
      %s11 = sphi 0, %s15
      %p12 = scmp.ge.s32.totalorder %s11, 4
      %s21 = sphi 0, %s23
      %s24 = sphi 0, %s21
      %s25 = sphi 0, %s24
      %s41 = sphi 0, %s25
      %s45 = sphi 0, %s45
      %s47 = sphi 0, %s45
      %s48 = sphi 0, %s47
      %s62 = sphi 0, %s48
      %s66 = sphi 0, %s66
      %s68 = sphi 0, %s66
      %s69 = sphi 0, %s68
      %s83 = sphi 0, %s69
      %s87 = sphi 0, %s87
      %s89 = sphi 0, %s87
      %s90 = sphi 0, %s89
      %s104 = sphi 0, %s90
      %s108 = sphi 0, %s108
      %s110 = sphi 0, %s108
      %s111 = sphi 0, %s110
      %s125 = sphi 0, %s111
      %s131 = sphi 0, %s133
      %s134 = sphi 0, %s131
      %s135 = sphi 0, %s134
      %s151 = sphi 0, %s135
    $region4: #{baseline_model_forward.1} parent=1 // loop_header_branch
      %14 = sbr.rel (%p12) target = $region8
    $region5: #{baseline_model_forward.1} parent=1 // loop_body
      %s16 = ssub.s32 %s11, 1
      %s17 = ssub.s32 %s11, 2
      %s18 = sadd.s32 %s11, 1
      %s19 = ssub.s32 %s11, %s18
      %p20 = scmp.eq.s32.totalorder %s19, 0
      %s22 = sadd.s32 %s21, 1
      %s23 = scalar_select %p20, %s21, %s22
      %p26 = pneg %p20
      %p27 = scmp.eq.s32.totalorder %s11, 1
      %p28 = por %p26, %p27
      %p29 = scmp.ne.s32.totalorder %s21, %s24
      %p30 = scmp.eq.s32.totalorder %s11, 0
      %p31 = por %p29, %p30
      %p32 = scmp.ne.s32.totalorder %s21, %s24
      %p33 = scmp.eq.s32.totalorder %s16, 1
      %p34 = por %p32, %p33
      %p35 = scmp.ne.s32.totalorder %s24, %s25
      %p36 = scmp.eq.s32.totalorder %s16, 0
      %p37 = por %p35, %p36
      %p38 = scmp.ne.s32.totalorder %s24, %s25
      %p39 = scmp.eq.s32.totalorder %s17, 1
      %p40 = por %p38, %p39
      %p42 = scmp.ne.s32.totalorder %s25, %s41
      %p43 = scmp.eq.s32.totalorder %s17, 0
      %p44 = por %p42, %p43
      %s46 = sadd.s32 %s45, 1
      %p49 = scmp.eq.s32.totalorder %s11, 1
      %p50 = scmp.ne.s32.totalorder %s45, %s47
      %p51 = scmp.eq.s32.totalorder %s11, 0
      %p52 = por %p50, %p51
      %p53 = scmp.ne.s32.totalorder %s45, %s47
      %p54 = scmp.eq.s32.totalorder %s16, 1
      %p55 = por %p53, %p54
      %p56 = scmp.ne.s32.totalorder %s47, %s48
      %p57 = scmp.eq.s32.totalorder %s16, 0
      %p58 = por %p56, %p57
      %p59 = scmp.ne.s32.totalorder %s47, %s48
      %p60 = scmp.eq.s32.totalorder %s17, 1
      %p61 = por %p59, %p60
      %p63 = scmp.ne.s32.totalorder %s48, %s62
      %p64 = scmp.eq.s32.totalorder %s17, 0
      %p65 = por %p63, %p64
      %s67 = sadd.s32 %s66, 1
      %p70 = scmp.eq.s32.totalorder %s11, 1
      %p71 = scmp.ne.s32.totalorder %s66, %s68
      %p72 = scmp.eq.s32.totalorder %s11, 0
      %p73 = por %p71, %p72
      %p74 = scmp.ne.s32.totalorder %s66, %s68
      %p75 = scmp.eq.s32.totalorder %s16, 1
      %p76 = por %p74, %p75
      %p77 = scmp.ne.s32.totalorder %s68, %s69
      %p78 = scmp.eq.s32.totalorder %s16, 0
      %p79 = por %p77, %p78
      %p80 = scmp.ne.s32.totalorder %s68, %s69
      %p81 = scmp.eq.s32.totalorder %s17, 1
      %p82 = por %p80, %p81
      %p84 = scmp.ne.s32.totalorder %s69, %s83
      %p85 = scmp.eq.s32.totalorder %s17, 0
      %p86 = por %p84, %p85
      %s88 = sadd.s32 %s87, 1
      %p91 = scmp.eq.s32.totalorder %s11, 1
      %p92 = scmp.ne.s32.totalorder %s87, %s89
      %p93 = scmp.eq.s32.totalorder %s11, 0
      %p94 = por %p92, %p93
      %p95 = scmp.ne.s32.totalorder %s87, %s89
      %p96 = scmp.eq.s32.totalorder %s16, 1
      %p97 = por %p95, %p96
      %p98 = scmp.ne.s32.totalorder %s89, %s90
      %p99 = scmp.eq.s32.totalorder %s16, 0
      %p100 = por %p98, %p99
      %p101 = scmp.ne.s32.totalorder %s89, %s90
      %p102 = scmp.eq.s32.totalorder %s17, 1
      %p103 = por %p101, %p102
      %p105 = scmp.ne.s32.totalorder %s90, %s104
      %p106 = scmp.eq.s32.totalorder %s17, 0
      %p107 = por %p105, %p106
      %s109 = sadd.s32 %s108, 1
      %p112 = scmp.eq.s32.totalorder %s11, 1
      %p113 = scmp.ne.s32.totalorder %s108, %s110
      %p114 = scmp.eq.s32.totalorder %s11, 0
      %p115 = por %p113, %p114
      %p116 = scmp.ne.s32.totalorder %s108, %s110
      %p117 = scmp.eq.s32.totalorder %s16, 1
      %p118 = por %p116, %p117
      %p119 = scmp.ne.s32.totalorder %s110, %s111
      %p120 = scmp.eq.s32.totalorder %s16, 0
      %p121 = por %p119, %p120
      %p122 = scmp.ne.s32.totalorder %s110, %s111
      %p123 = scmp.eq.s32.totalorder %s17, 1
      %p124 = por %p122, %p123
      %p126 = scmp.ne.s32.totalorder %s111, %s125
      %p127 = scmp.eq.s32.totalorder %s17, 0
      %p128 = por %p126, %p127
      %s129 = ssub.s32 %s11, %s18
      %p130 = scmp.eq.s32.totalorder %s129, 0
      %s132 = sadd.s32 %s131, 1
      %s133 = scalar_select %p130, %s131, %s132
      %p136 = pneg %p130
      %p137 = scmp.eq.s32.totalorder %s11, 1
      %p138 = por %p136, %p137
      %p139 = scmp.ne.s32.totalorder %s131, %s134
      %p140 = scmp.eq.s32.totalorder %s11, 0
      %p141 = por %p139, %p140
      %p142 = scmp.ne.s32.totalorder %s131, %s134
      %p143 = scmp.eq.s32.totalorder %s16, 1
      %p144 = por %p142, %p143
      %p145 = scmp.ne.s32.totalorder %s134, %s135
      %p146 = scmp.eq.s32.totalorder %s16, 0
      %p147 = por %p145, %p146
      %p148 = scmp.ne.s32.totalorder %s134, %s135
      %p149 = scmp.eq.s32.totalorder %s17, 1
      %p150 = por %p148, %p149
      %p152 = scmp.ne.s32.totalorder %s135, %s151
      %p153 = scmp.eq.s32.totalorder %s17, 0
      %p154 = por %p152, %p153
      %p155 = scmp.le.s32.totalorder 1, %s11
      %p156 = scmp.lt.s32.totalorder %s11, 3
      %p157 = pnand %p155, %p156
      %p158 = pneg %p157
      // Predicated region
      $region9: #{baseline_model_forward.1} parent=5 // pred_check
        _
      $region10: #{baseline_model_forward.1} parent=5 // pred_check_branch
        %160 = sbr.rel (%p157) target = $region12
      $region11: #{baseline_model_forward.1} parent=5 // pred_region
        %s161 = ssub.s32 %s11, 1
        // Predicated region
        $region13: #{baseline_model_forward.1} parent=11 // pred_check
          %p162 = pneg %p58
        $region14: #{baseline_model_forward.1} parent=11 // pred_check_branch
          %164 = sbr.rel (%p162) target = $region16
        $region15: #{baseline_model_forward.1} parent=11 // pred_region
          _
        $region16: #{baseline_model_forward.1} parent=11 // pred_fallthru
          _
        // Predicated region
        $region17: #{baseline_model_forward.1} parent=11 // pred_check
          %p165 = pneg %p79
        $region18: #{baseline_model_forward.1} parent=11 // pred_check_branch
          %167 = sbr.rel (%p165) target = $region20
        $region19: #{baseline_model_forward.1} parent=11 // pred_region
          _
        $region20: #{baseline_model_forward.1} parent=11 // pred_fallthru
          _
        // Predicated region
        $region21: #{baseline_model_forward.1} parent=11 // pred_check
          %p168 = pneg %p100
        $region22: #{baseline_model_forward.1} parent=11 // pred_check_branch
          %170 = sbr.rel (%p168) target = $region24
        $region23: #{baseline_model_forward.1} parent=11 // pred_region
          _
        $region24: #{baseline_model_forward.1} parent=11 // pred_fallthru
          _
        // Predicated region
        $region25: #{baseline_model_forward.1} parent=11 // pred_check
          %p171 = pneg %p121
        $region26: #{baseline_model_forward.1} parent=11 // pred_check_branch
          %173 = sbr.rel (%p171) target = $region28
        $region27: #{baseline_model_forward.1} parent=11 // pred_region
          _
        $region28: #{baseline_model_forward.1} parent=11 // pred_fallthru
          _
      $region12: #{baseline_model_forward.1} parent=5 // pred_fallthru
        _
      %p174 = scmp.lt.s32.totalorder %s11, 2
      // Predicated region
      $region29: #{baseline_model_forward.1} parent=5 // pred_check
        %p175 = pneg %p174
      $region30: #{baseline_model_forward.1} parent=5 // pred_check_branch
        %177 = sbr.rel (%p175) target = $region32
      $region31: #{baseline_model_forward.1} parent=5 // pred_region
        // Predicated region
        $region33: #{baseline_model_forward.1} parent=31 // pred_check
          %p178 = pneg %p31
        $region34: #{baseline_model_forward.1} parent=31 // pred_check_branch
          %180 = sbr.rel (%p178) target = $region36
        $region35: #{baseline_model_forward.1} parent=31 // pred_region
          %s181 = smul.u32 4, %s11
          %s182 = ssub.s32 7, %s181
          %p183 = scmp.lt.s32.totalorder %s182, 4
          %s184 = scalar_select %p183, %s182, 4
          %s185 = smul.u32 128, %s184
          %p186 = scmp.lt.s32.totalorder %s181, 6
          %s187 = scalar_select %p186, %s181, 6
          %s188 = smul.addr %s187, 8
          %s189 = scalar_lea.vmem %s0, %s188
          %s190 = smul.u32 4, %s11
          %s191 = ssub.s32 7, %s190
          %p192 = scmp.lt.s32.totalorder %s191, 4
          %s193 = scalar_select %p192, %s191, 4
          %s194 = smul.u32 128, %s193
        $region36: #{baseline_model_forward.1} parent=31 // pred_fallthru
          _
      $region32: #{baseline_model_forward.1} parent=5 // pred_fallthru
        _
      %p195 = scmp.le.s32.totalorder 1, %s11
      %p196 = scmp.lt.s32.totalorder %s11, 3
      %p197 = pnand %p195, %p196
      %p198 = pneg %p197
      // Predicated region
      $region37: #{baseline_model_forward.1} parent=5 // pred_check
        _
      $region38: #{baseline_model_forward.1} parent=5 // pred_check_branch
        %200 = sbr.rel (%p197) target = $region40
      $region39: #{baseline_model_forward.1} parent=5 // pred_region
        %s201 = ssub.s32 %s11, 1
        %s202 = smul.u32 4, %s16
        %s203 = ssub.s32 7, %s202
        %p204 = scmp.lt.s32.totalorder %s203, 4
        %s205 = scalar_select %p204, %s203, 4
        %s206 = smul.u32 128, %s205
        %p207 = scmp.lt.s32.totalorder %s202, 6
        %s208 = scalar_select %p207, %s202, 6
        %s209 = smul.addr %s208, 8
        %s210 = scalar_lea.vmem %s0, %s209
        %p211 = pneg %p37
        %p212 = pneg %p34
        %p213 = pneg %p58
        %p214 = pneg %p55
        %p215 = pneg %p79
        %p216 = pneg %p76
        %p217 = pneg %p100
        %p218 = pneg %p97
        %p219 = pneg %p121
        %p220 = pneg %p118
        %p221 = pneg %p147
        %p222 = pneg %p144
        %s223 = sand.u32 %s134, 1
        %s224 = sand.u32 %s134, 1
        %s225 = smul.addr %s224, 16
        %s226 = scalar_lea.vmem [#allocation2], %s225
        %s227 = smul.u32 4, %s16
        %s228 = ssub.s32 7, %s227
        %p229 = scmp.lt.s32.totalorder %s228, 4
        %s230 = scalar_select %p229, %s228, 4
        %s231 = smul.u32 128, %s230
        %p232 = scmp.lt.s32.totalorder %s227, 6
        %s233 = scalar_select %p232, %s227, 6
        %s234 = smul.addr %s233, 8
        %s235 = scalar_lea.vmem %s0, %s234
        %s236 = smul.u32 4, %s16
        %s237 = ssub.s32 7, %s236
        %p238 = scmp.lt.s32.totalorder %s237, 4
        %s239 = scalar_select %p238, %s237, 4
        %s240 = smul.u32 128, %s239
        %s241 = smul.u32 4, %s16
        %s242 = ssub.s32 7, %s241
        %p243 = scmp.lt.s32.totalorder %s242, 4
        %s244 = scalar_select %p243, %s242, 4
        %s245 = smul.u32 64, %s244
        %v247 = vld [vmem:[%s235] sm:$0xff]
        %v248 = vld [vmem:[%s235 + $0x8] sm:$0xff]
        %v249 = vld [vmem:[%s235 + $0x10] sm:$0xff]
        %v250 = vld [vmem:[%s235 + $0x18] sm:$0xff]
        %v251 = vpack.c.bf16 %v248, %v247
        %v252 = vpack.c.bf16 %v250, %v249
        %v253 = vld [vmem:[%s1] sm:$0xf]
        %v254 = vld [vmem:[%s1 + $0x4] sm:$0xf]
        %v255 = vld [vmem:[%s1 + $0x8] sm:$0xf]
        %v256 = vld [vmem:[%s1 + $0xc] sm:$0xf]
        %v257 = vld [vmem:[%s2] sm:$0x1]
        %v259 = vlaneseq
        %v260 = vshrl.u32 %v259, 7
        %v261 = vsub.s32 0, %v260
        %v262 = vrot.slane %v257, %v261
        %v268 = vunpack.c.l.b16 %v253
        %v269 = vunpack.c.l.b16 %v254
        %v270 = vunpack.c.l.b16 %v255
        %v271 = vunpack.c.l.b16 %v256
        %v272 = vpack.c.b16 %v269, %v268
        %v273 = vpack.c.b16 %v271, %v270
        %vm276 = vcmask 261120
        %v278 = vsel %vm276, %v251, 0
        %v281 = vsel %vm276, %v252, 0
        %283 = vmatprep.subr.bf16.mxu0 0
        %284 = vmatpush1.bf16.msra.mxu0 %v272
        %285 = vmatprep.subr.bf16.mxu0 0
        %286 = vmatpush1.bf16.msra.mxu0 %v273
        %287 = vmatprep.subr.bf16.mxu0 0
        %288 = vmatpush1.bf16.msra.mxu0 0
        %289 = vmatprep.subr.bf16.mxu0 0
        %290 = vmatpush1.bf16.msra.mxu0 0
        %291 = vmatprep.subr.bf16.mxu0 0
        %292 = vmatpush1.bf16.msra.mxu0 0
        %293 = vmatprep.subr.bf16.mxu0 0
        %294 = vmatpush1.bf16.msra.mxu0 0
        %295 = vmatprep.subr.bf16.mxu0 0
        %296 = vmatpush1.bf16.msra.mxu0 0
        %297 = vmatprep.subr.bf16.mxu0 0
        %298 = vmatpush1.bf16.msra.mxu0 0
        %299 = vmatprep.subr.bf16.mxu0 0
        %300 = vmatpush1.bf16.msra.mxu0 0
        %301 = vmatprep.subr.bf16.mxu0 0
        %302 = vmatpush1.bf16.msra.mxu0 0
        %303 = vmatprep.subr.bf16.mxu0 0
        %304 = vmatpush1.bf16.msra.mxu0 0
        %305 = vmatprep.subr.bf16.mxu0 0
        %306 = vmatpush1.bf16.msra.mxu0 0
        %307 = vmatprep.subr.bf16.mxu0 0
        %308 = vmatpush1.bf16.msra.mxu0 0
        %309 = vmatprep.subr.bf16.mxu0 0
        %310 = vmatpush1.bf16.msra.mxu0 0
        %311 = vmatprep.subr.bf16.mxu0 0
        %312 = vmatpush1.bf16.msra.mxu0 0
        %313 = vmatprep.subr.bf16.mxu0 0
        %314 = vmatpush1.bf16.msra.mxu0 0
        %315 = vmatprep.mubr.bf16.mxu0 0
        %316 = vmatmul.mubr.bf16.gmra.mrb[0].mxu0 %v278
        %v317 = vpop.f32.mrb[0].mxu0
        %v318 = vadd.f32 %v262, %v317
        %v319 = vpop.f32.mrb[0].mxu0
        %v320 = vpop.f32.mrb[0].mxu0
        %v321 = vadd.f32 %v262, %v320
        %v322 = vpop.f32.mrb[0].mxu0
        %323 = vmatprep.mubr.bf16.mxu0 0
        %324 = vmatmul.mubr.bf16.gmra.mrb[0].mxu0 %v281
        %v325 = vpop.f32.mrb[0].mxu0
        %v326 = vadd.f32 %v262, %v325
        %v327 = vpop.f32.mrb[0].mxu0
        %v328 = vpop.f32.mrb[0].mxu0
        %v329 = vadd.f32 %v262, %v328
        %v330 = vpop.f32.mrb[0].mxu0
        %331 = vdwg.mxu0
        %v332 = vmax.f32 %v318, 0.0
        %v333 = vmax.f32 %v321, 0.0
        %v334 = vmax.f32 %v326, 0.0
        %v335 = vmax.f32 %v329, 0.0
        %v336 = vpack.c.bf16 %v333, %v332
        %v337 = vpack.c.bf16 %v335, %v334
        %v338 = vld [vmem:[%s3] sm:$0xf]
        %v339 = vld [vmem:[%s3 + $0x4] sm:$0xf]
        %v340 = vld [vmem:[%s3 + $0x8] sm:$0xf]
        %v341 = vld [vmem:[%s3 + $0xc] sm:$0xf]
        %v342 = vld [vmem:[%s3 + $0x10] sm:$0xf]
        %v343 = vld [vmem:[%s3 + $0x14] sm:$0xf]
        %v344 = vld [vmem:[%s3 + $0x18] sm:$0xf]
        %v345 = vld [vmem:[%s3 + $0x1c] sm:$0xf]
        %v346 = vld [vmem:[%s3 + $0x20] sm:$0xf]
        %v347 = vld [vmem:[%s3 + $0x24] sm:$0xf]
        %v348 = vld [vmem:[%s3 + $0x28] sm:$0xf]
        %v349 = vld [vmem:[%s3 + $0x2c] sm:$0xf]
        %v350 = vld [vmem:[%s3 + $0x30] sm:$0xf]
        %v351 = vld [vmem:[%s3 + $0x34] sm:$0xf]
        %v352 = vld [vmem:[%s3 + $0x38] sm:$0xf]
        %v353 = vld [vmem:[%s3 + $0x3c] sm:$0xf]
        %v354 = vld [vmem:[%s4] sm:$0x1]
        %v356 = vlaneseq
        %v357 = vshrl.u32 %v356, 7
        %v358 = vsub.s32 0, %v357
        %v359 = vrot.slane %v354, %v358
        %v377 = vunpack.c.l.b16 %v338
        %v378 = vunpack.c.l.b16 %v339
        %v379 = vunpack.c.l.b16 %v340
        %v380 = vunpack.c.l.b16 %v341
        %v381 = vunpack.c.l.b16 %v342
        %v382 = vunpack.c.l.b16 %v343
        %v383 = vunpack.c.l.b16 %v344
        %v384 = vunpack.c.l.b16 %v345
        %v385 = vunpack.c.l.b16 %v346
        %v386 = vunpack.c.l.b16 %v347
        %v387 = vunpack.c.l.b16 %v348
        %v388 = vunpack.c.l.b16 %v349
        %v389 = vunpack.c.l.b16 %v350
        %v390 = vunpack.c.l.b16 %v351
        %v391 = vunpack.c.l.b16 %v352
        %v392 = vunpack.c.l.b16 %v353
        %v393 = vpack.c.b16 %v378, %v377
        %v394 = vpack.c.b16 %v380, %v379
        %v395 = vpack.c.b16 %v382, %v381
        %v396 = vpack.c.b16 %v384, %v383
        %v397 = vpack.c.b16 %v386, %v385
        %v398 = vpack.c.b16 %v388, %v387
        %v399 = vpack.c.b16 %v390, %v389
        %v400 = vpack.c.b16 %v392, %v391
        %409 = vmatprep.subr.bf16.mxu0 0
        %410 = vmatpush1.bf16.msra.mxu0 %v393
        %411 = vmatprep.subr.bf16.mxu0 0
        %412 = vmatpush1.bf16.msra.mxu0 %v394
        %413 = vmatprep.subr.bf16.mxu0 0
        %414 = vmatpush1.bf16.msra.mxu0 %v395
        %415 = vmatprep.subr.bf16.mxu0 0
        %416 = vmatpush1.bf16.msra.mxu0 %v396
        %417 = vmatprep.subr.bf16.mxu0 0
        %418 = vmatpush1.bf16.msra.mxu0 %v397
        %419 = vmatprep.subr.bf16.mxu0 0
        %420 = vmatpush1.bf16.msra.mxu0 %v398
        %421 = vmatprep.subr.bf16.mxu0 0
        %422 = vmatpush1.bf16.msra.mxu0 %v399
        %423 = vmatprep.subr.bf16.mxu0 0
        %424 = vmatpush1.bf16.msra.mxu0 %v400
        %425 = vmatprep.subr.bf16.mxu0 0
        %426 = vmatpush1.bf16.msra.mxu0 0
        %427 = vmatprep.subr.bf16.mxu0 0
        %428 = vmatpush1.bf16.msra.mxu0 0
        %429 = vmatprep.subr.bf16.mxu0 0
        %430 = vmatpush1.bf16.msra.mxu0 0
        %431 = vmatprep.subr.bf16.mxu0 0
        %432 = vmatpush1.bf16.msra.mxu0 0
        %433 = vmatprep.subr.bf16.mxu0 0
        %434 = vmatpush1.bf16.msra.mxu0 0
        %435 = vmatprep.subr.bf16.mxu0 0
        %436 = vmatpush1.bf16.msra.mxu0 0
        %437 = vmatprep.subr.bf16.mxu0 0
        %438 = vmatpush1.bf16.msra.mxu0 0
        %439 = vmatprep.subr.bf16.mxu0 0
        %440 = vmatpush1.bf16.msra.mxu0 0
        %441 = vmatprep.mubr.bf16.mxu0 0
        %442 = vmatmul.mubr.bf16.gmra.mrb[0].mxu0 %v336
        %v443 = vpop.f32.mrb[0].mxu0
        %v444 = vadd.f32 %v359, %v443
        %v445 = vpop.f32.mrb[0].mxu0
        %v446 = vpop.f32.mrb[0].mxu0
        %v447 = vadd.f32 %v359, %v446
        %v448 = vpop.f32.mrb[0].mxu0
        %449 = vmatprep.mubr.bf16.mxu0 0
        %450 = vmatmul.mubr.bf16.gmra.mrb[0].mxu0 %v337
        %v451 = vpop.f32.mrb[0].mxu0
        %v452 = vadd.f32 %v359, %v451
        %v453 = vpop.f32.mrb[0].mxu0
        %v454 = vpop.f32.mrb[0].mxu0
        %v455 = vadd.f32 %v359, %v454
        %v456 = vpop.f32.mrb[0].mxu0
        %457 = vdwg.mxu0
        %458 = vmax.xlane.f32.xlu0 %v444
        %v459 = vpop.xlane.xlu0 %458
        %460 = vmax.xlane.f32.xlu0 %v447
        %v461 = vpop.xlane.xlu0 %460
        %462 = vmax.xlane.f32.xlu0 %v452
        %v463 = vpop.xlane.xlu0 %462
        %464 = vmax.xlane.f32.xlu0 %v455
        %v465 = vpop.xlane.xlu0 %464
        %v466 = vsub.f32 %v444, %v459
        %v467 = vsub.f32 %v447, %v461
        %v468 = vsub.f32 %v452, %v463
        %v469 = vsub.f32 %v455, %v465
        %v470 = vmul.f32 %v466, 1.442695
        %v471 = vpow.pop %v470
        %v472 = vmul.f32 %v467, 1.442695
        %v473 = vpow.pop %v472
        %v474 = vmul.f32 %v468, 1.442695
        %v475 = vpow.pop %v474
        %v476 = vmul.f32 %v469, 1.442695
        %v477 = vpow.pop %v476
        %478 = vadd.xlane.f32.xlu0 %v471
        %v479 = vpop.xlane.xlu0 %478
        %480 = vadd.xlane.f32.xlu0 %v473
        %v481 = vpop.xlane.xlu0 %480
        %482 = vadd.xlane.f32.xlu0 %v475
        %v483 = vpop.xlane.xlu0 %482
        %484 = vadd.xlane.f32.xlu0 %v477
        %v485 = vpop.xlane.xlu0 %484
        %v486 = vrcp.pop %v479
        %v487 = vmul.f32 %v471, %v486
        %v488 = vrcp.pop %v481
        %v489 = vmul.f32 %v473, %v488
        %v490 = vrcp.pop %v483
        %v491 = vmul.f32 %v475, %v490
        %v492 = vrcp.pop %v485
        %v493 = vmul.f32 %v477, %v492
        %v494 = vpack.c.bf16 %v489, %v487
        %v495 = vpack.c.bf16 %v493, %v491
        %v498 = vunpack.c.l.b16 %v494
        %v499 = vunpack.c.h.b16 %v494
        %v500 = vunpack.c.l.b16 %v495
        %v501 = vunpack.c.h.b16 %v495
        %v502 = vpack.c.b16 %v498, %v498
        %v503 = vpack.c.b16 %v499, %v499
        %v504 = vpack.c.b16 %v500, %v500
        %v505 = vpack.c.b16 %v501, %v501
        %510 = vst [vmem:[%s226] sm:$0xf] %v502
        %511 = vst [vmem:[%s226 + $0x4] sm:$0xf] %v503
        %512 = vst [vmem:[%s226 + $0x8] sm:$0xf] %v504
        %513 = vst [vmem:[%s226 + $0xc] sm:$0xf] %v505
        %s514 = sand.u32 %s134, 1
        %s515 = sand.u32 %s134, 1
        %s516 = smul.addr %s515, 16
        %s517 = scalar_lea.vmem [#allocation2], %s516
        // Predicated region
        $region41: #{baseline_model_forward.1} parent=39 // pred_check
          %p518 = pneg %p144
        $region42: #{baseline_model_forward.1} parent=39 // pred_check_branch
          %520 = sbr.rel (%p518) target = $region44
        $region43: #{baseline_model_forward.1} parent=39 // pred_region
          %s521 = smul.u32 4, %s16
          %s522 = ssub.s32 7, %s521
          %p523 = scmp.lt.s32.totalorder %s522, 4
          %s524 = scalar_select %p523, %s522, 4
          %s525 = smul.u32 64, %s524
          %p526 = scmp.ne.s32.totalorder 0, %s525
          %s527 = smul.addr %s521, 4
          %s528 = scalar_lea.vmem %s5, %s527
          // Predicated region
          $region45: #{baseline_model_forward.1} parent=43 // pred_check
            %p529 = pneg %p526
          $region46: #{baseline_model_forward.1} parent=43 // pred_check_branch
            %531 = sbr.rel (%p529) target = $region48
          $region47: #{baseline_model_forward.1} parent=43 // pred_region
            // Predicated region
            $region49: #{baseline_model_forward.1} parent=47 // pred_check
              _
            $region50: #{baseline_model_forward.1} parent=47 // pred_check_branch
              %533 = sbr.rel target = $region52
            $region51: #{baseline_model_forward.1} parent=47 // pred_region
              // Predicated region
              $region71: #{baseline_model_forward.1} parent=51 // pred_check
                _
              $region72: #{baseline_model_forward.1} parent=51 // pred_check_branch
                %588 = sbr.rel (0) target = $region74
              $region73: #{baseline_model_forward.1} parent=51 // pred_region
                %s590 = sshrl.u32 %s524, 2
                // While loop
                $region75: #{baseline_model_forward.1} parent=73 // loop_pre_header
                  _
                $region76: #{baseline_model_forward.1} parent=73 // loop_header
                  %s592 = sphi 0, %s594
                  %p593 = scmp.ge.s32.totalorder %s592, %s590
                  %s597 = sphi 0, %s610
                  %s598 = sphi %s517, %s613
                  %s599 = sphi %s528, %s614
                $region77: #{baseline_model_forward.1} parent=73 // loop_header_branch
                  %596 = sbr.rel (%p593) target = $region81
                $region78: #{baseline_model_forward.1} parent=73 // loop_body
                  %v600 = vld [vmem:[%s598] sm:$0xf]
                  %601 = vst [vmem:[%s599] sm:$0xf] %v600
                  %v602 = vld [vmem:[%s598 + $0x4] sm:$0xf]
                  %603 = vst [vmem:[%s599 + $0x4] sm:$0xf] %v602
                  %v604 = vld [vmem:[%s598 + $0x8] sm:$0xf]
                  %605 = vst [vmem:[%s599 + $0x8] sm:$0xf] %v604
                  %v606 = vld [vmem:[%s598 + $0xc] sm:$0xf]
                  %607 = vst [vmem:[%s599 + $0xc] sm:$0xf] %v606
                  %s608 = sadd.s32 1, %s597
                  %p609 = scmp.ge.s32.totalorder %s608, %s590
                  %s610 = scalar_select %p609, 0, %s608
                  %s611 = smul.u32 %s610, 16
                  %s612 = smul.u32 %s610, 16
                  %s613 = scalar_lea.vmem %s517, %s611 [#allocation2]
                  %s614 = scalar_lea.vmem %s528, %s612
                $region79: #{baseline_model_forward.1} parent=73 // loop_footer
                  %s594 = sadd.s32 %s592, 1
                $region80: #{baseline_model_forward.1} parent=73 // loop_footer_branch
                  %591 = sbr.rel target = $region76
                $region81: #{baseline_model_forward.1} parent=73 // loop_exit
                  _
                %s615 = sshrl.u32 %s524, 2
                %s616 = sand.u32 %s524, 3
                %s617 = smul.u32 %s615, 4
                %s618 = smul.u32 4, %s617
                %s619 = scalar_lea.vmem %s517, %s618 [#allocation2]
                %s620 = smul.u32 4, %s617
                %s621 = scalar_lea.vmem %s528, %s620
                // While loop
                $region82: #{baseline_model_forward.1} parent=73 // loop_pre_header
                  _
                $region83: #{baseline_model_forward.1} parent=73 // loop_header
                  %s623 = sphi 0, %s625
                  %p624 = scmp.ge.s32.totalorder %s623, %s616
                  %s628 = sphi 0, %s635
                  %s629 = sphi %s619, %s638
                  %s630 = sphi %s621, %s639
                $region84: #{baseline_model_forward.1} parent=73 // loop_header_branch
                  %627 = sbr.rel (%p624) target = $region88
                $region85: #{baseline_model_forward.1} parent=73 // loop_body
                  %v631 = vld [vmem:[%s629] sm:$0xf]
                  %632 = vst [vmem:[%s630] sm:$0xf] %v631
                  %s633 = sadd.s32 1, %s628
                  %p634 = scmp.ge.s32.totalorder %s633, %s616
                  %s635 = scalar_select %p634, 0, %s633
                  %s636 = smul.u32 %s635, 4
                  %s637 = smul.u32 %s635, 4
                  %s638 = scalar_lea.vmem %s619, %s636 [#allocation2]
                  %s639 = scalar_lea.vmem %s621, %s637
                $region86: #{baseline_model_forward.1} parent=73 // loop_footer
                  %s625 = sadd.s32 %s623, 1
                $region87: #{baseline_model_forward.1} parent=73 // loop_footer_branch
                  %622 = sbr.rel target = $region83
                $region88: #{baseline_model_forward.1} parent=73 // loop_exit
                  _
              $region74: #{baseline_model_forward.1} parent=51 // pred_fallthru
                _
            $region52: #{baseline_model_forward.1} parent=47 // pred_fallthru
              _
            // Predicated region
            $region53: #{baseline_model_forward.1} parent=47 // pred_check
              _
            $region54: #{baseline_model_forward.1} parent=47 // pred_check_branch
              %535 = sbr.rel (0) target = $region56
            $region55: #{baseline_model_forward.1} parent=47 // pred_region
              %s537 = sshrl.u32 %s524, 2
              // While loop
              $region57: #{baseline_model_forward.1} parent=55 // loop_pre_header
                _
              $region58: #{baseline_model_forward.1} parent=55 // loop_header
                %s539 = sphi 0, %s541
                %p540 = scmp.ge.s32.totalorder %s539, %s537
                %s544 = sphi 0, %s557
                %s545 = sphi %s517, %s560
                %s546 = sphi %s528, %s561
              $region59: #{baseline_model_forward.1} parent=55 // loop_header_branch
                %543 = sbr.rel (%p540) target = $region63
              $region60: #{baseline_model_forward.1} parent=55 // loop_body
                %v547 = vld [vmem:[%s545] sm:$0xf]
                %548 = vst [vmem:[%s546] sm:$0xf] %v547
                %v549 = vld [vmem:[%s545 + $0x4] sm:$0xf]
                %550 = vst [vmem:[%s546 + $0x4] sm:$0xf] %v549
                %v551 = vld [vmem:[%s545 + $0x8] sm:$0xf]
                %552 = vst [vmem:[%s546 + $0x8] sm:$0xf] %v551
                %v553 = vld [vmem:[%s545 + $0xc] sm:$0xf]
                %554 = vst [vmem:[%s546 + $0xc] sm:$0xf] %v553
                %s555 = sadd.s32 1, %s544
                %p556 = scmp.ge.s32.totalorder %s555, %s537
                %s557 = scalar_select %p556, 0, %s555
                %s558 = smul.u32 %s557, 16
                %s559 = smul.u32 %s557, 16
                %s560 = scalar_lea.vmem %s517, %s558 [#allocation2]
                %s561 = scalar_lea.vmem %s528, %s559
              $region61: #{baseline_model_forward.1} parent=55 // loop_footer
                %s541 = sadd.s32 %s539, 1
              $region62: #{baseline_model_forward.1} parent=55 // loop_footer_branch
                %538 = sbr.rel target = $region58
              $region63: #{baseline_model_forward.1} parent=55 // loop_exit
                _
              %s562 = sshrl.u32 %s524, 2
              %s563 = sand.u32 %s524, 3
              %s564 = smul.u32 %s562, 4
              %s565 = smul.u32 4, %s564
              %s566 = scalar_lea.vmem %s517, %s565 [#allocation2]
              %s567 = smul.u32 4, %s564
              %s568 = scalar_lea.vmem %s528, %s567
              // While loop
              $region64: #{baseline_model_forward.1} parent=55 // loop_pre_header
                _
              $region65: #{baseline_model_forward.1} parent=55 // loop_header
                %s570 = sphi 0, %s572
                %p571 = scmp.ge.s32.totalorder %s570, %s563
                %s575 = sphi 0, %s582
                %s576 = sphi %s566, %s585
                %s577 = sphi %s568, %s586
              $region66: #{baseline_model_forward.1} parent=55 // loop_header_branch
                %574 = sbr.rel (%p571) target = $region70
              $region67: #{baseline_model_forward.1} parent=55 // loop_body
                %v578 = vld [vmem:[%s576] sm:$0xf]
                %579 = vst [vmem:[%s577] sm:$0xf] %v578
                %s580 = sadd.s32 1, %s575
                %p581 = scmp.ge.s32.totalorder %s580, %s563
                %s582 = scalar_select %p581, 0, %s580
                %s583 = smul.u32 %s582, 4
                %s584 = smul.u32 %s582, 4
                %s585 = scalar_lea.vmem %s566, %s583 [#allocation2]
                %s586 = scalar_lea.vmem %s568, %s584
              $region68: #{baseline_model_forward.1} parent=55 // loop_footer
                %s572 = sadd.s32 %s570, 1
              $region69: #{baseline_model_forward.1} parent=55 // loop_footer_branch
                %569 = sbr.rel target = $region65
              $region70: #{baseline_model_forward.1} parent=55 // loop_exit
                _
            $region56: #{baseline_model_forward.1} parent=47 // pred_fallthru
              _
          $region48: #{baseline_model_forward.1} parent=43 // pred_fallthru
            _
          %640 = vnop
        $region44: #{baseline_model_forward.1} parent=39 // pred_fallthru
          _
      $region40: #{baseline_model_forward.1} parent=5 // pred_fallthru
        _
      %p641 = scmp.le.s32.totalorder 2, %s11
      // Predicated region
      $region89: #{baseline_model_forward.1} parent=5 // pred_check
        %p642 = pneg %p641
      $region90: #{baseline_model_forward.1} parent=5 // pred_check_branch
        %644 = sbr.rel (%p642) target = $region92
      $region91: #{baseline_model_forward.1} parent=5 // pred_region
        %s645 = ssub.s32 %s11, 2
        // Predicated region
        $region93: #{baseline_model_forward.1} parent=91 // pred_check
          %p646 = pneg %p150
        $region94: #{baseline_model_forward.1} parent=91 // pred_check_branch
          %648 = sbr.rel (%p646) target = $region96
        $region95: #{baseline_model_forward.1} parent=91 // pred_region
          %s649 = sand.u32 %s135, 1
          %s650 = sand.u32 %s135, 1
          %s651 = smul.addr %s650, 16
          %s652 = scalar_lea.vmem [#allocation2], %s651
        $region96: #{baseline_model_forward.1} parent=91 // pred_fallthru
          _
      $region92: #{baseline_model_forward.1} parent=5 // pred_fallthru
        _
    $region6: #{baseline_model_forward.1} parent=1 // loop_footer
      %s15 = sadd.s32 1, %s11
    $region7: #{baseline_model_forward.1} parent=1 // loop_footer_branch
      %10 = sbr.rel target = $region3
    $region8: #{baseline_model_forward.1} parent=1 // loop_exit
      _

</llo_original>
